<compile_context>
chip_gen: v7x
topology: tpu7x:2x2x1
jax: 0.10.0
libtpu: 0.0.40
codegen_flags: <defaults>
</compile_context>

<pallas_src>
import functools

import numpy as np
import jax
import jax.numpy as jnp
from jax import lax
from jax.experimental import pallas as pl
from jax.experimental.pallas import tpu as pltpu

# ---- STP parameters (TFSTP.__init__ -> stpPara) ----
U0       = 0.15
D_PARAM  = 0.05 * 20     # 1.0
F_PARAM  = 0.5 * 20      # 10.0
LITTLE_F = 0.15
R0       = 1.0
LANES    = 128


def _cdiv(a, b):
    return -(-a // b)


def _round_up(a, b):
    return _cdiv(a, b) * b


# ---------------------------------------------------------------------------
# Glue: spike -> inter-spike-interval (vectorized equivalent of spike2interval)
# ---------------------------------------------------------------------------
def spike2interval(spikes):
    """spikes: (T, H, W) float32 {0,1}. Returns (T, H, W) float32 ISI (inf where undefined)."""
    T = spikes.shape[0]
    t_idx = jnp.arange(T, dtype=jnp.float32)[:, None, None]
    is_spk = spikes > 0
    # largest spike time strictly < t
    prev_incl = lax.cummax(jnp.where(is_spk, t_idx, -jnp.inf), axis=0)
    prev_excl = jnp.concatenate(
        [jnp.full((1,) + spikes.shape[1:], -jnp.inf, jnp.float32), prev_incl[:-1]], axis=0
    )
    # smallest spike time >= t
    next_incl = lax.cummin(jnp.where(is_spk, t_idx, jnp.inf), axis=0, reverse=True)
    valid = jnp.isfinite(prev_excl) & jnp.isfinite(next_incl)
    return jnp.where(valid, next_incl - prev_excl, jnp.inf).astype(jnp.float32)


# ---------------------------------------------------------------------------
# Pallas kernel: chunked STP recurrence; image written at the last time chunk.
#   misi_ref : (Tc, tile_rows, 128) bf16   masked ISI (>=0 -> update with that
#                                          ISI, -1 sentinel -> keep old state)
#   out_ref  : (tile_rows, 128) f32        un-normalized image for this tile
#   R_s, u_s : (tile_rows, 128) f32        VMEM-resident state across time chunks
# ---------------------------------------------------------------------------
def _tfstp_kernel(misi_ref, out_ref, R_s, u_s, *, tc):
    c = pl.program_id(1)          # time-chunk index ("arbitrary", inner grid axis)

    @pl.when(c == 0)
    def _():
        R_s[...] = jnp.full(R_s.shape, R0, R_s.dtype)
        u_s[...] = jnp.full(u_s.shape, U0, u_s.dtype)

    neg_inv_D = -1.0 / D_PARAM
    neg_inv_F = -1.0 / F_PARAM

    R = R_s[...]
    u = u_s[...]
    # Static unroll over the time chunk: static leading-dim loads; the per-step
    # data dependency chain bounds live ranges, so register pressure stays low.
    for i in range(tc):
        m = misi_ref[i].astype(jnp.float32)        # (tile_rows, 128)
        upd = m >= 0.0                             # -1 sentinel / padding -> no update
        exp_D = jnp.exp(m * neg_inv_D)
        exp_F = jnp.exp(m * neg_inv_F)
        R_new = 1.0 - (1.0 - R * (1.0 - u)) * exp_D   # uses old u (matches torch order)
        u_new = U0 + (u + LITTLE_F * (1.0 - u) - U0) * exp_F
        R = jnp.where(upd, R_new, R)
        u = jnp.where(upd, u_new, u)
    R_s[...] = R
    u_s[...] = u

    @pl.when(c == pl.num_programs(1) - 1)
    def _():
        rho_u = -1.0 / (F_PARAM * jnp.log((u - U0) / (F_PARAM - U0 + u * (1.0 - LITTLE_F))))
        rho_R = -1.0 / (D_PARAM * jnp.log((1.0 - R) / (1.0 - R * (1.0 - u))))
        out_ref[...] = rho_u + rho_R


# ---------------------------------------------------------------------------
# Wrapper
# ---------------------------------------------------------------------------
def _tfstp_impl(spikes_btHW, max_tile_rows=256, tc_max=16):
    """spikes_btHW: (1, T, H, W) float32 of {0,1}. Returns (1, 1, H, W) float32."""
    spikes = spikes_btHW[0].astype(jnp.float32)
    T, H, W = spikes.shape
    assert T >= 2, "need at least 2 timesteps"
    t_half = T // 2                          # recurrence steps t = 1 .. T//2

    intervals = spike2interval(spikes)       # (T, H, W)

    # Precompute the update mask (prev_isi stays intervals[0] forever, as in torch)
    isi0 = intervals[0][None]                                   # (1, H, W)
    isi_t = lax.slice_in_dim(intervals, 1, t_half + 1, axis=0)  # (t_half, H, W)
    spk_t = lax.slice_in_dim(spikes, 1, t_half + 1, axis=0)
    upd = ((isi_t != isi0) & (spk_t == 0.0)) | (isi_t == 1.0)
    masked_isi = jnp.where(upd, isi_t, -1.0)                    # single narrow stream

    # ---- lane-dense spatial layout: flatten (H, W) -> (P, 128), P % tile_rows == 0
    n_pix = H * W
    rows = _cdiv(n_pix, LANES)
    max_tile_rows = _round_up(max(int(max_tile_rows), 16), 16)
    tile_rows = min(_round_up(rows, 16), max_tile_rows)         # multiple of 16 (bf16 tile)
    P = _round_up(rows, tile_rows)
    n_spatial = P // tile_rows

    # ---- time chunking
    tc = max(1, min(int(tc_max), t_half))
    t_pad = _round_up(t_half, tc)
    n_tchunks = t_pad // tc

    flat = masked_isi.reshape(t_half, n_pix)
    flat = jnp.pad(flat, ((0, t_pad - t_half), (0, P * LANES - n_pix)),
                   constant_values=-1.0)                        # sentinel -> no-op steps/pixels
    stream = flat.reshape(t_pad, P, LANES).astype(jnp.bfloat16)  # small-int ISIs exact in bf16

    image_padded = pl.pallas_call(
        functools.partial(_tfstp_kernel, tc=tc),
        out_shape=jax.ShapeDtypeStruct((P, LANES), jnp.float32),
        grid_spec=pltpu.PrefetchScalarGridSpec(
            num_scalar_prefetch=0,
            grid=(n_spatial, n_tchunks),
            in_specs=[
                pl.BlockSpec((tc, tile_rows, LANES), lambda s, c: (c, s, 0)),
            ],
            out_specs=pl.BlockSpec((tile_rows, LANES), lambda s, c: (s, 0)),
            scratch_shapes=[
                pltpu.VMEM((tile_rows, LANES), jnp.float32),    # R state
                pltpu.VMEM((tile_rows, LANES), jnp.float32),    # u state
            ],
        ),
        compiler_params=pltpu.CompilerParams(
            dimension_semantics=("parallel", "arbitrary")),
    )(stream)

    # Drop padded pixels BEFORE the min/max reduction, then normalize (fused in jit).
    image = image_padded.reshape(P * LANES)[:n_pix].reshape(H, W)
    imin = jnp.min(image)
    imax = jnp.max(image)
    denom = imax - imin
    image = jnp.where(denom != 0.0, (image - imin) / denom, image)
    return image[None, None]


tfstp_forward = jax.jit(_tfstp_impl, static_argnames=("max_tile_rows", "tc_max"))


# ---------------------------------------------------------------------------
# Pure-numpy reference (mirrors the PyTorch code) for verification.
# ---------------------------------------------------------------------------
def _numpy_reference(spikes_np):
    T, H, W = spikes_np.shape
    isi = np.ones((T, H, W)) * np.inf
    for i in range(H):
        for j in range(W):
            idx = np.nonzero(spikes_np[:, i, j])[0]
            if idx.shape[0] > 1:
                d = idx[1:] - idx[:-1]
                for k in range(len(d)):
                    isi[idx[k] + 1: idx[k + 1] + 1, i, j] = d[k]
    R = np.ones((H, W)); u = np.ones((H, W)) * U0
    Rt = np.ones((T, H, W)); ut = np.ones((T, H, W)) * U0
    prev_isi = isi[0]
    with np.errstate(divide="ignore", over="ignore", invalid="ignore"):
        for t in range(1, T):
            tmp_isi = isi[t]
            upd = ((tmp_isi != prev_isi) & (spikes_np[t] == 0)) | (tmp_isi == 1)
            exp_D = np.exp(-tmp_isi[upd] / D_PARAM)
            R[upd] = 1 - (1 - R[upd] * (1 - u[upd])) * exp_D
            exp_F = np.exp(-tmp_isi[upd] / F_PARAM)
            u[upd] = U0 + (u[upd] + LITTLE_F * (1 - u[upd]) - U0) * exp_F
            Rt[t] = R; ut[t] = u
        th = T // 2
        uu, RR = ut[th], Rt[th]
        rho_u = -1 / (F_PARAM * np.log((uu - U0) / (F_PARAM - U0 + uu * (1 - LITTLE_F))))
        rho_R = -1 / (D_PARAM * np.log((1 - RR) / (1 - RR * (1 - uu))))
        img = rho_u + rho_R
    if img.max() != img.min():
        img = (img - img.min()) / (img.max() - img.min())
    return img[None, None]


if __name__ == "__main__":
    key = jax.random.PRNGKey(0)
    keys = jax.random.split(key, 3)

    configs = [
        # (T, H, W, kwargs)
        (12, 16, 128, {}),                                      # lane-aligned, single tile / chunk
        (10, 13, 50, {"tc_max": 4}),                            # ragged spatial + time padding
        (12, 30, 128, {"max_tile_rows": 16, "tc_max": 2}),      # 2 spatial tiles, 3 time chunks
    ]

    for (T, H, W, kw), k in zip(configs, keys):
        spikes = (jax.random.uniform(k, (1, T, H, W)) < 0.3).astype(jnp.float32)
        out = tfstp_forward(spikes, **kw)
        out = jax.block_until_ready(out)
        assert out.shape == (1, 1, H, W), out.shape

        ref = _numpy_reference(np.asarray(spikes[0]))
        np.testing.assert_allclose(np.asarray(out, dtype=np.float64), ref,
                                   rtol=1e-3, atol=1e-3)

    print("KERNEL_OK")
</pallas_src>

<mosaic_0001>
module attributes {stable_mosaic.version = 11 : i64} {
  func.func @_tfstp_kernel(%arg0: i32, %arg1: i32, %arg2: memref<6x16x128xbf16, #tpu.memory_space<vmem>>, %arg3: memref<16x128xf32, #tpu.memory_space<vmem>>, %arg4: memref<16x128xf32, #tpu.memory_space<vmem>>, %arg5: memref<16x128xf32, #tpu.memory_space<vmem>>) attributes {dimension_semantics = [#tpu.dimension_semantics<parallel>, #tpu.dimension_semantics<arbitrary>], iteration_bounds = array<i64: 1, 1>, scalar_prefetch = 0 : i64, scratch_operands = 2 : i64, tpu.core_type = #tpu.core_type<tc>, window_params = [{transform_indices = @transform_0, window_bounds = array<i64: 6, 16, 128>}, {transform_indices = @transform_1, window_bounds = array<i64: 16, 128>}]} {
    %c0_i32 = arith.constant 0 : i32
    %0 = arith.cmpi eq, %arg1, %c0_i32 : i32
    %1 = arith.extui %0 : i1 to i32
    %c0_i32_0 = arith.constant 0 : i32
    %2 = arith.cmpi ne, %1, %c0_i32_0 : i32
    scf.if %2 {
      %cst_82 = arith.constant 1.000000e+00 : f32
      %196 = vector.broadcast %cst_82 : f32 to vector<16x128xf32>
      %c0_83 = arith.constant 0 : index
      %c0_84 = arith.constant 0 : index
      %197 = vector.load %arg4[%c0_83, %c0_84] : memref<16x128xf32, #tpu.memory_space<vmem>>, vector<16x128xf32>
      tpu.vector_store %arg4[%c0_83, %c0_84], %196 {strides = array<i32>} : memref<16x128xf32, #tpu.memory_space<vmem>>, vector<16x128xf32>,
      %cst_85 = arith.constant 1.500000e-01 : f32
      %198 = vector.broadcast %cst_85 : f32 to vector<16x128xf32>
      %c0_86 = arith.constant 0 : index
      %c0_87 = arith.constant 0 : index
      %199 = vector.load %arg5[%c0_86, %c0_87] : memref<16x128xf32, #tpu.memory_space<vmem>>, vector<16x128xf32>
      tpu.vector_store %arg5[%c0_86, %c0_87], %198 {strides = array<i32>} : memref<16x128xf32, #tpu.memory_space<vmem>>, vector<16x128xf32>,
    } else {
    }
    %c0 = arith.constant 0 : index
    %c0_1 = arith.constant 0 : index
    %3 = vector.load %arg4[%c0, %c0_1] : memref<16x128xf32, #tpu.memory_space<vmem>>, vector<16x128xf32>
    %c0_2 = arith.constant 0 : index
    %c0_3 = arith.constant 0 : index
    %4 = vector.load %arg5[%c0_2, %c0_3] : memref<16x128xf32, #tpu.memory_space<vmem>>, vector<16x128xf32>
    %c0_4 = arith.constant 0 : index
    %c0_5 = arith.constant 0 : index
    %c0_6 = arith.constant 0 : index
    %5 = vector.load %arg2[%c0_4, %c0_5, %c0_6] : memref<6x16x128xbf16, #tpu.memory_space<vmem>>, vector<1x16x128xbf16>
    %6 = vector.shape_cast %5 : vector<1x16x128xbf16> to vector<16x128xbf16>
    %7 = arith.extf %6 : vector<16x128xbf16> to vector<16x128xf32>
    %cst = arith.constant 0.000000e+00 : f32
    %8 = vector.broadcast %cst : f32 to vector<16x128xf32>
    %9 = arith.cmpf oge, %7, %8 : vector<16x128xf32>
    %cst_7 = arith.constant -1.000000e+00 : f32
    %10 = vector.broadcast %cst_7 : f32 to vector<16x128xf32>
    %11 = arith.mulf %7, %10 : vector<16x128xf32>
    %12 = math.exp %11 : vector<16x128xf32>
    %cst_8 = arith.constant -1.000000e-01 : f32
    %13 = vector.broadcast %cst_8 : f32 to vector<16x128xf32>
    %14 = arith.mulf %7, %13 : vector<16x128xf32>
    %15 = math.exp %14 : vector<16x128xf32>
    %cst_9 = arith.constant 1.000000e+00 : f32
    %16 = vector.broadcast %cst_9 : f32 to vector<16x128xf32>
    %17 = arith.subf %16, %4 : vector<16x128xf32>
    %18 = arith.mulf %3, %17 : vector<16x128xf32>
    %cst_10 = arith.constant 1.000000e+00 : f32
    %19 = vector.broadcast %cst_10 : f32 to vector<16x128xf32>
    %20 = arith.subf %19, %18 : vector<16x128xf32>
    %21 = arith.mulf %20, %12 : vector<16x128xf32>
    %cst_11 = arith.constant 1.000000e+00 : f32
    %22 = vector.broadcast %cst_11 : f32 to vector<16x128xf32>
    %23 = arith.subf %22, %21 : vector<16x128xf32>
    %cst_12 = arith.constant 1.000000e+00 : f32
    %24 = vector.broadcast %cst_12 : f32 to vector<16x128xf32>
    %25 = arith.subf %24, %4 : vector<16x128xf32>
    %cst_13 = arith.constant 1.500000e-01 : f32
    %26 = vector.broadcast %cst_13 : f32 to vector<16x128xf32>
    %27 = arith.mulf %26, %25 : vector<16x128xf32>
    %28 = arith.addf %4, %27 : vector<16x128xf32>
    %cst_14 = arith.constant 1.500000e-01 : f32
    %29 = vector.broadcast %cst_14 : f32 to vector<16x128xf32>
    %30 = arith.subf %28, %29 : vector<16x128xf32>
    %31 = arith.mulf %30, %15 : vector<16x128xf32>
    %cst_15 = arith.constant 1.500000e-01 : f32
    %32 = vector.broadcast %cst_15 : f32 to vector<16x128xf32>
    %33 = arith.addf %32, %31 : vector<16x128xf32>
    %34 = arith.select %9, %23, %3 : vector<16x128xi1>, vector<16x128xf32>
    %35 = arith.select %9, %33, %4 : vector<16x128xi1>, vector<16x128xf32>
    %c1 = arith.constant 1 : index
    %c0_16 = arith.constant 0 : index
    %c0_17 = arith.constant 0 : index
    %36 = vector.load %arg2[%c1, %c0_16, %c0_17] : memref<6x16x128xbf16, #tpu.memory_space<vmem>>, vector<1x16x128xbf16>
    %37 = vector.shape_cast %36 : vector<1x16x128xbf16> to vector<16x128xbf16>
    %38 = arith.extf %37 : vector<16x128xbf16> to vector<16x128xf32>
    %cst_18 = arith.constant 0.000000e+00 : f32
    %39 = vector.broadcast %cst_18 : f32 to vector<16x128xf32>
    %40 = arith.cmpf oge, %38, %39 : vector<16x128xf32>
    %cst_19 = arith.constant -1.000000e+00 : f32
    %41 = vector.broadcast %cst_19 : f32 to vector<16x128xf32>
    %42 = arith.mulf %38, %41 : vector<16x128xf32>
    %43 = math.exp %42 : vector<16x128xf32>
    %cst_20 = arith.constant -1.000000e-01 : f32
    %44 = vector.broadcast %cst_20 : f32 to vector<16x128xf32>
    %45 = arith.mulf %38, %44 : vector<16x128xf32>
    %46 = math.exp %45 : vector<16x128xf32>
    %cst_21 = arith.constant 1.000000e+00 : f32
    %47 = vector.broadcast %cst_21 : f32 to vector<16x128xf32>
    %48 = arith.subf %47, %35 : vector<16x128xf32>
    %49 = arith.mulf %34, %48 : vector<16x128xf32>
    %cst_22 = arith.constant 1.000000e+00 : f32
    %50 = vector.broadcast %cst_22 : f32 to vector<16x128xf32>
    %51 = arith.subf %50, %49 : vector<16x128xf32>
    %52 = arith.mulf %51, %43 : vector<16x128xf32>
    %cst_23 = arith.constant 1.000000e+00 : f32
    %53 = vector.broadcast %cst_23 : f32 to vector<16x128xf32>
    %54 = arith.subf %53, %52 : vector<16x128xf32>
    %cst_24 = arith.constant 1.000000e+00 : f32
    %55 = vector.broadcast %cst_24 : f32 to vector<16x128xf32>
    %56 = arith.subf %55, %35 : vector<16x128xf32>
    %cst_25 = arith.constant 1.500000e-01 : f32
    %57 = vector.broadcast %cst_25 : f32 to vector<16x128xf32>
    %58 = arith.mulf %57, %56 : vector<16x128xf32>
    %59 = arith.addf %35, %58 : vector<16x128xf32>
    %cst_26 = arith.constant 1.500000e-01 : f32
    %60 = vector.broadcast %cst_26 : f32 to vector<16x128xf32>
    %61 = arith.subf %59, %60 : vector<16x128xf32>
    %62 = arith.mulf %61, %46 : vector<16x128xf32>
    %cst_27 = arith.constant 1.500000e-01 : f32
    %63 = vector.broadcast %cst_27 : f32 to vector<16x128xf32>
    %64 = arith.addf %63, %62 : vector<16x128xf32>
    %65 = arith.select %40, %54, %34 : vector<16x128xi1>, vector<16x128xf32>
    %66 = arith.select %40, %64, %35 : vector<16x128xi1>, vector<16x128xf32>
    %c2 = arith.constant 2 : index
    %c0_28 = arith.constant 0 : index
    %c0_29 = arith.constant 0 : index
    %67 = vector.load %arg2[%c2, %c0_28, %c0_29] : memref<6x16x128xbf16, #tpu.memory_space<vmem>>, vector<1x16x128xbf16>
    %68 = vector.shape_cast %67 : vector<1x16x128xbf16> to vector<16x128xbf16>
    %69 = arith.extf %68 : vector<16x128xbf16> to vector<16x128xf32>
    %cst_30 = arith.constant 0.000000e+00 : f32
    %70 = vector.broadcast %cst_30 : f32 to vector<16x128xf32>
    %71 = arith.cmpf oge, %69, %70 : vector<16x128xf32>
    %cst_31 = arith.constant -1.000000e+00 : f32
    %72 = vector.broadcast %cst_31 : f32 to vector<16x128xf32>
    %73 = arith.mulf %69, %72 : vector<16x128xf32>
    %74 = math.exp %73 : vector<16x128xf32>
    %cst_32 = arith.constant -1.000000e-01 : f32
    %75 = vector.broadcast %cst_32 : f32 to vector<16x128xf32>
    %76 = arith.mulf %69, %75 : vector<16x128xf32>
    %77 = math.exp %76 : vector<16x128xf32>
    %cst_33 = arith.constant 1.000000e+00 : f32
    %78 = vector.broadcast %cst_33 : f32 to vector<16x128xf32>
    %79 = arith.subf %78, %66 : vector<16x128xf32>
    %80 = arith.mulf %65, %79 : vector<16x128xf32>
    %cst_34 = arith.constant 1.000000e+00 : f32
    %81 = vector.broadcast %cst_34 : f32 to vector<16x128xf32>
    %82 = arith.subf %81, %80 : vector<16x128xf32>
    %83 = arith.mulf %82, %74 : vector<16x128xf32>
    %cst_35 = arith.constant 1.000000e+00 : f32
    %84 = vector.broadcast %cst_35 : f32 to vector<16x128xf32>
    %85 = arith.subf %84, %83 : vector<16x128xf32>
    %cst_36 = arith.constant 1.000000e+00 : f32
    %86 = vector.broadcast %cst_36 : f32 to vector<16x128xf32>
    %87 = arith.subf %86, %66 : vector<16x128xf32>
    %cst_37 = arith.constant 1.500000e-01 : f32
    %88 = vector.broadcast %cst_37 : f32 to vector<16x128xf32>
    %89 = arith.mulf %88, %87 : vector<16x128xf32>
    %90 = arith.addf %66, %89 : vector<16x128xf32>
    %cst_38 = arith.constant 1.500000e-01 : f32
    %91 = vector.broadcast %cst_38 : f32 to vector<16x128xf32>
    %92 = arith.subf %90, %91 : vector<16x128xf32>
    %93 = arith.mulf %92, %77 : vector<16x128xf32>
    %cst_39 = arith.constant 1.500000e-01 : f32
    %94 = vector.broadcast %cst_39 : f32 to vector<16x128xf32>
    %95 = arith.addf %94, %93 : vector<16x128xf32>
    %96 = arith.select %71, %85, %65 : vector<16x128xi1>, vector<16x128xf32>
    %97 = arith.select %71, %95, %66 : vector<16x128xi1>, vector<16x128xf32>
    %c3 = arith.constant 3 : index
    %c0_40 = arith.constant 0 : index
    %c0_41 = arith.constant 0 : index
    %98 = vector.load %arg2[%c3, %c0_40, %c0_41] : memref<6x16x128xbf16, #tpu.memory_space<vmem>>, vector<1x16x128xbf16>
    %99 = vector.shape_cast %98 : vector<1x16x128xbf16> to vector<16x128xbf16>
    %100 = arith.extf %99 : vector<16x128xbf16> to vector<16x128xf32>
    %cst_42 = arith.constant 0.000000e+00 : f32
    %101 = vector.broadcast %cst_42 : f32 to vector<16x128xf32>
    %102 = arith.cmpf oge, %100, %101 : vector<16x128xf32>
    %cst_43 = arith.constant -1.000000e+00 : f32
    %103 = vector.broadcast %cst_43 : f32 to vector<16x128xf32>
    %104 = arith.mulf %100, %103 : vector<16x128xf32>
    %105 = math.exp %104 : vector<16x128xf32>
    %cst_44 = arith.constant -1.000000e-01 : f32
    %106 = vector.broadcast %cst_44 : f32 to vector<16x128xf32>
    %107 = arith.mulf %100, %106 : vector<16x128xf32>
    %108 = math.exp %107 : vector<16x128xf32>
    %cst_45 = arith.constant 1.000000e+00 : f32
    %109 = vector.broadcast %cst_45 : f32 to vector<16x128xf32>
    %110 = arith.subf %109, %97 : vector<16x128xf32>
    %111 = arith.mulf %96, %110 : vector<16x128xf32>
    %cst_46 = arith.constant 1.000000e+00 : f32
    %112 = vector.broadcast %cst_46 : f32 to vector<16x128xf32>
    %113 = arith.subf %112, %111 : vector<16x128xf32>
    %114 = arith.mulf %113, %105 : vector<16x128xf32>
    %cst_47 = arith.constant 1.000000e+00 : f32
    %115 = vector.broadcast %cst_47 : f32 to vector<16x128xf32>
    %116 = arith.subf %115, %114 : vector<16x128xf32>
    %cst_48 = arith.constant 1.000000e+00 : f32
    %117 = vector.broadcast %cst_48 : f32 to vector<16x128xf32>
    %118 = arith.subf %117, %97 : vector<16x128xf32>
    %cst_49 = arith.constant 1.500000e-01 : f32
    %119 = vector.broadcast %cst_49 : f32 to vector<16x128xf32>
    %120 = arith.mulf %119, %118 : vector<16x128xf32>
    %121 = arith.addf %97, %120 : vector<16x128xf32>
    %cst_50 = arith.constant 1.500000e-01 : f32
    %122 = vector.broadcast %cst_50 : f32 to vector<16x128xf32>
    %123 = arith.subf %121, %122 : vector<16x128xf32>
    %124 = arith.mulf %123, %108 : vector<16x128xf32>
    %cst_51 = arith.constant 1.500000e-01 : f32
    %125 = vector.broadcast %cst_51 : f32 to vector<16x128xf32>
    %126 = arith.addf %125, %124 : vector<16x128xf32>
    %127 = arith.select %102, %116, %96 : vector<16x128xi1>, vector<16x128xf32>
    %128 = arith.select %102, %126, %97 : vector<16x128xi1>, vector<16x128xf32>
    %c4 = arith.constant 4 : index
    %c0_52 = arith.constant 0 : index
    %c0_53 = arith.constant 0 : index
    %129 = vector.load %arg2[%c4, %c0_52, %c0_53] : memref<6x16x128xbf16, #tpu.memory_space<vmem>>, vector<1x16x128xbf16>
    %130 = vector.shape_cast %129 : vector<1x16x128xbf16> to vector<16x128xbf16>
    %131 = arith.extf %130 : vector<16x128xbf16> to vector<16x128xf32>
    %cst_54 = arith.constant 0.000000e+00 : f32
    %132 = vector.broadcast %cst_54 : f32 to vector<16x128xf32>
    %133 = arith.cmpf oge, %131, %132 : vector<16x128xf32>
    %cst_55 = arith.constant -1.000000e+00 : f32
    %134 = vector.broadcast %cst_55 : f32 to vector<16x128xf32>
    %135 = arith.mulf %131, %134 : vector<16x128xf32>
    %136 = math.exp %135 : vector<16x128xf32>
    %cst_56 = arith.constant -1.000000e-01 : f32
    %137 = vector.broadcast %cst_56 : f32 to vector<16x128xf32>
    %138 = arith.mulf %131, %137 : vector<16x128xf32>
    %139 = math.exp %138 : vector<16x128xf32>
    %cst_57 = arith.constant 1.000000e+00 : f32
    %140 = vector.broadcast %cst_57 : f32 to vector<16x128xf32>
    %141 = arith.subf %140, %128 : vector<16x128xf32>
    %142 = arith.mulf %127, %141 : vector<16x128xf32>
    %cst_58 = arith.constant 1.000000e+00 : f32
    %143 = vector.broadcast %cst_58 : f32 to vector<16x128xf32>
    %144 = arith.subf %143, %142 : vector<16x128xf32>
    %145 = arith.mulf %144, %136 : vector<16x128xf32>
    %cst_59 = arith.constant 1.000000e+00 : f32
    %146 = vector.broadcast %cst_59 : f32 to vector<16x128xf32>
    %147 = arith.subf %146, %145 : vector<16x128xf32>
    %cst_60 = arith.constant 1.000000e+00 : f32
    %148 = vector.broadcast %cst_60 : f32 to vector<16x128xf32>
    %149 = arith.subf %148, %128 : vector<16x128xf32>
    %cst_61 = arith.constant 1.500000e-01 : f32
    %150 = vector.broadcast %cst_61 : f32 to vector<16x128xf32>
    %151 = arith.mulf %150, %149 : vector<16x128xf32>
    %152 = arith.addf %128, %151 : vector<16x128xf32>
    %cst_62 = arith.constant 1.500000e-01 : f32
    %153 = vector.broadcast %cst_62 : f32 to vector<16x128xf32>
    %154 = arith.subf %152, %153 : vector<16x128xf32>
    %155 = arith.mulf %154, %139 : vector<16x128xf32>
    %cst_63 = arith.constant 1.500000e-01 : f32
    %156 = vector.broadcast %cst_63 : f32 to vector<16x128xf32>
    %157 = arith.addf %156, %155 : vector<16x128xf32>
    %158 = arith.select %133, %147, %127 : vector<16x128xi1>, vector<16x128xf32>
    %159 = arith.select %133, %157, %128 : vector<16x128xi1>, vector<16x128xf32>
    %c5 = arith.constant 5 : index
    %c0_64 = arith.constant 0 : index
    %c0_65 = arith.constant 0 : index
    %160 = vector.load %arg2[%c5, %c0_64, %c0_65] : memref<6x16x128xbf16, #tpu.memory_space<vmem>>, vector<1x16x128xbf16>
    %161 = vector.shape_cast %160 : vector<1x16x128xbf16> to vector<16x128xbf16>
    %162 = arith.extf %161 : vector<16x128xbf16> to vector<16x128xf32>
    %cst_66 = arith.constant 0.000000e+00 : f32
    %163 = vector.broadcast %cst_66 : f32 to vector<16x128xf32>
    %164 = arith.cmpf oge, %162, %163 : vector<16x128xf32>
    %cst_67 = arith.constant -1.000000e+00 : f32
    %165 = vector.broadcast %cst_67 : f32 to vector<16x128xf32>
    %166 = arith.mulf %162, %165 : vector<16x128xf32>
    %167 = math.exp %166 : vector<16x128xf32>
    %cst_68 = arith.constant -1.000000e-01 : f32
    %168 = vector.broadcast %cst_68 : f32 to vector<16x128xf32>
    %169 = arith.mulf %162, %168 : vector<16x128xf32>
    %170 = math.exp %169 : vector<16x128xf32>
    %cst_69 = arith.constant 1.000000e+00 : f32
    %171 = vector.broadcast %cst_69 : f32 to vector<16x128xf32>
    %172 = arith.subf %171, %159 : vector<16x128xf32>
    %173 = arith.mulf %158, %172 : vector<16x128xf32>
    %cst_70 = arith.constant 1.000000e+00 : f32
    %174 = vector.broadcast %cst_70 : f32 to vector<16x128xf32>
    %175 = arith.subf %174, %173 : vector<16x128xf32>
    %176 = arith.mulf %175, %167 : vector<16x128xf32>
    %cst_71 = arith.constant 1.000000e+00 : f32
    %177 = vector.broadcast %cst_71 : f32 to vector<16x128xf32>
    %178 = arith.subf %177, %176 : vector<16x128xf32>
    %cst_72 = arith.constant 1.000000e+00 : f32
    %179 = vector.broadcast %cst_72 : f32 to vector<16x128xf32>
    %180 = arith.subf %179, %159 : vector<16x128xf32>
    %cst_73 = arith.constant 1.500000e-01 : f32
    %181 = vector.broadcast %cst_73 : f32 to vector<16x128xf32>
    %182 = arith.mulf %181, %180 : vector<16x128xf32>
    %183 = arith.addf %159, %182 : vector<16x128xf32>
    %cst_74 = arith.constant 1.500000e-01 : f32
    %184 = vector.broadcast %cst_74 : f32 to vector<16x128xf32>
    %185 = arith.subf %183, %184 : vector<16x128xf32>
    %186 = arith.mulf %185, %170 : vector<16x128xf32>
    %cst_75 = arith.constant 1.500000e-01 : f32
    %187 = vector.broadcast %cst_75 : f32 to vector<16x128xf32>
    %188 = arith.addf %187, %186 : vector<16x128xf32>
    %189 = arith.select %164, %178, %158 : vector<16x128xi1>, vector<16x128xf32>
    %190 = arith.select %164, %188, %159 : vector<16x128xi1>, vector<16x128xf32>
    %c0_76 = arith.constant 0 : index
    %c0_77 = arith.constant 0 : index
    %191 = vector.load %arg4[%c0_76, %c0_77] : memref<16x128xf32, #tpu.memory_space<vmem>>, vector<16x128xf32>
    tpu.vector_store %arg4[%c0_76, %c0_77], %189 {strides = array<i32>} : memref<16x128xf32, #tpu.memory_space<vmem>>, vector<16x128xf32>,
    %c0_78 = arith.constant 0 : index
    %c0_79 = arith.constant 0 : index
    %192 = vector.load %arg5[%c0_78, %c0_79] : memref<16x128xf32, #tpu.memory_space<vmem>>, vector<16x128xf32>
    tpu.vector_store %arg5[%c0_78, %c0_79], %190 {strides = array<i32>} : memref<16x128xf32, #tpu.memory_space<vmem>>, vector<16x128xf32>,
    %c0_i32_80 = arith.constant 0 : i32
    %193 = arith.cmpi eq, %arg1, %c0_i32_80 : i32
    %194 = arith.extui %193 : i1 to i32
    %c0_i32_81 = arith.constant 0 : i32
    %195 = arith.cmpi ne, %194, %c0_i32_81 : i32
    scf.if %195 {
      %cst_82 = arith.constant 1.500000e-01 : f32
      %196 = vector.broadcast %cst_82 : f32 to vector<16x128xf32>
      %197 = arith.subf %190, %196 : vector<16x128xf32>
      %cst_83 = arith.constant 8.500000e-01 : f32
      %198 = vector.broadcast %cst_83 : f32 to vector<16x128xf32>
      %199 = arith.mulf %190, %198 : vector<16x128xf32>
      %cst_84 = arith.constant 9.850000e+00 : f32
      %200 = vector.broadcast %cst_84 : f32 to vector<16x128xf32>
      %201 = arith.addf %200, %199 : vector<16x128xf32>
      %202 = arith.divf %197, %201 : vector<16x128xf32>
      %203 = math.log %202 : vector<16x128xf32>
      %cst_85 = arith.constant 1.000000e+01 : f32
      %204 = vector.broadcast %cst_85 : f32 to vector<16x128xf32>
      %205 = arith.mulf %204, %203 : vector<16x128xf32>
      %cst_86 = arith.constant -1.000000e+00 : f32
      %206 = vector.broadcast %cst_86 : f32 to vector<16x128xf32>
      %207 = arith.divf %206, %205 : vector<16x128xf32>
      %cst_87 = arith.constant 1.000000e+00 : f32
      %208 = vector.broadcast %cst_87 : f32 to vector<16x128xf32>
      %209 = arith.subf %208, %189 : vector<16x128xf32>
      %cst_88 = arith.constant 1.000000e+00 : f32
      %210 = vector.broadcast %cst_88 : f32 to vector<16x128xf32>
      %211 = arith.subf %210, %190 : vector<16x128xf32>
      %212 = arith.mulf %189, %211 : vector<16x128xf32>
      %cst_89 = arith.constant 1.000000e+00 : f32
      %213 = vector.broadcast %cst_89 : f32 to vector<16x128xf32>
      %214 = arith.subf %213, %212 : vector<16x128xf32>
      %215 = arith.divf %209, %214 : vector<16x128xf32>
      %216 = math.log %215 : vector<16x128xf32>
      %cst_90 = arith.constant 1.000000e+00 : f32
      %217 = vector.broadcast %cst_90 : f32 to vector<16x128xf32>
      %218 = arith.mulf %217, %216 : vector<16x128xf32>
      %cst_91 = arith.constant -1.000000e+00 : f32
      %219 = vector.broadcast %cst_91 : f32 to vector<16x128xf32>
      %220 = arith.divf %219, %218 : vector<16x128xf32>
      %221 = arith.addf %207, %220 : vector<16x128xf32>
      %c0_92 = arith.constant 0 : index
      %c0_93 = arith.constant 0 : index
      %222 = vector.load %arg3[%c0_92, %c0_93] : memref<16x128xf32, #tpu.memory_space<vmem>>, vector<16x128xf32>
      tpu.vector_store %arg3[%c0_92, %c0_93], %221 {strides = array<i32>} : memref<16x128xf32, #tpu.memory_space<vmem>>, vector<16x128xf32>,
    } else {
    }
    return
  }
  func.func @transform_0(%arg0: i32, %arg1: i32) -> (i32, i32, i32) {
    %c0_i32 = arith.constant 0 : i32
    %c0_i32_0 = arith.constant 0 : i32
    return %arg1, %arg0, %c0_i32 : i32, i32, i32
  }
  func.func @transform_1(%arg0: i32, %arg1: i32) -> (i32, i32) {
    %c0_i32 = arith.constant 0 : i32
    %c0_i32_0 = arith.constant 0 : i32
    return %arg0, %c0_i32 : i32, i32
  }
}

</mosaic_0001>

<llo_original>
// kernel: _tfstp_impl.1
$region0: #{_tfstp_impl.1}
  #allocation0 [shape = 'u32[]', space=smem, size = 0x4, offset = 0x4, fixed_abs, tag = 'smem constant byte address 0x4 - core index']
  #allocation1 [shape = 'u32[144,128]{1,0:T(1,128)}', space=vmem, size = 0x12000, scoped, tag = 'internal scratch']
  #allocation2 [shape = 'f32[16,128]{1,0:T(8,128)}', space=vmem, size = 0x2000, scoped, tag = 'scratch operand']
  #allocation3 [shape = 'f32[16,128]{1,0:T(8,128)}', space=vmem, size = 0x2000, scoped, tag = 'scratch operand']
  %s0 = inlined_call_operand.vmem [shape: bf16[6,16,128], index: 0, kind: input, shape index: {}]
  %s1 = inlined_call_operand.vmem [shape: f32[16,128], index: 1, kind: output, shape index: {}]
  %s2 = sld [smem:[#allocation0]]
  $region22: #{_tfstp_impl.1} parent=0
    _
  %s4 = ssub.s32 1, %s2
  %s5 = scalar_select 0, %s4, %s2
  // Predicated region
  $region2: #{_tfstp_impl.1} parent=0 // pred_check
    _
  $region3: #{_tfstp_impl.1} parent=0 // pred_check_branch
    %7 = sbr.rel (0) target = $region5
  $region4: #{_tfstp_impl.1} parent=0 // pred_region
    _
  $region5: #{_tfstp_impl.1} parent=0 // pred_fallthru
    _
  %p8 = scmp.eq.s32.totalorder 0, 0
  // Predicated region
  $region6: #{_tfstp_impl.1} parent=0 // pred_check
    %p9 = pneg %p8
  $region7: #{_tfstp_impl.1} parent=0 // pred_check_branch
    %11 = sbr.rel (%p9) target = $region9
  $region8: #{_tfstp_impl.1} parent=0 // pred_region
    %12 = vst [vmem:[#allocation2] sm:$0xff] 1.0
    %13 = vst [vmem:[#allocation2 + $0x8] sm:$0xff] 1.0
    %14 = vst [vmem:[#allocation3] sm:$0xff] 0.15
    %15 = vst [vmem:[#allocation3 + $0x8] sm:$0xff] 0.15
  $region9: #{_tfstp_impl.1} parent=0 // pred_fallthru
    _
  %v16 = vld [vmem:[#allocation2] sm:$0xff]
  %v17 = vld [vmem:[#allocation2 + $0x8] sm:$0xff]
  %v18 = vld [vmem:[#allocation3] sm:$0xff]
  %v19 = vld [vmem:[#allocation3 + $0x8] sm:$0xff]
  %v20 = vld [vmem:[%s0] sm:$0xf]
  %v21 = vld [vmem:[%s0 + $0x4] sm:$0xf]
  %v22 = vunpack.c.l.bf16 %v20
  %v23 = vunpack.c.l.bf16 %v21
  %vm24 = vcmp.ge.f32.partialorder %v22, 0.0
  %vm25 = vcmp.ge.f32.partialorder %v23, 0.0
  %v26 = vmul.f32 %v22, -1.0
  %v27 = vmul.f32 %v23, -1.0
  %v28 = vmul.f32 %v26, 1.442695
  %v29 = vpow.pop %v28
  %v30 = vmul.f32 %v27, 1.442695
  %v31 = vpow.pop %v30
  %v32 = vmul.f32 %v22, -0.1
  %v33 = vmul.f32 %v23, -0.1
  %v34 = vmul.f32 %v32, 1.442695
  %v35 = vpow.pop %v34
  %v36 = vmul.f32 %v33, 1.442695
  %v37 = vpow.pop %v36
  %v38 = vsub.f32 1.0, %v18
  %v39 = vsub.f32 1.0, %v19
  %v40 = vmul.f32 %v16, %v38
  %v41 = vmul.f32 %v17, %v39
  %v42 = vsub.f32 1.0, %v40
  %v43 = vsub.f32 1.0, %v41
  %v44 = vmul.f32 %v42, %v29
  %v45 = vmul.f32 %v43, %v31
  %v46 = vsub.f32 1.0, %v44
  %v47 = vsub.f32 1.0, %v45
  %v48 = vmul.f32 %v38, 0.15
  %v49 = vmul.f32 %v39, 0.15
  %v50 = vadd.f32 %v18, %v48
  %v51 = vadd.f32 %v19, %v49
  %v52 = vsub.f32 %v50, 0.15
  %v53 = vsub.f32 %v51, 0.15
  %v54 = vmul.f32 %v52, %v35
  %v55 = vmul.f32 %v53, %v37
  %v56 = vadd.f32 %v54, 0.15
  %v57 = vadd.f32 %v55, 0.15
  %v58 = vsel %vm24, %v46, %v16
  %v59 = vsel %vm25, %v47, %v17
  %v60 = vsel %vm24, %v56, %v18
  %v61 = vsel %vm25, %v57, %v19
  %s62 = scalar_lea.vmem %s0, 8
  %v63 = vld [vmem:[%s62] sm:$0xf]
  %v64 = vld [vmem:[%s62 + $0x4] sm:$0xf]
  %v65 = vunpack.c.l.bf16 %v63
  %v66 = vunpack.c.l.bf16 %v64
  %vm67 = vcmp.ge.f32.partialorder %v65, 0.0
  %vm68 = vcmp.ge.f32.partialorder %v66, 0.0
  %v69 = vmul.f32 %v65, -1.0
  %v70 = vmul.f32 %v66, -1.0
  %v71 = vmul.f32 %v69, 1.442695
  %v72 = vpow.pop %v71
  %v73 = vmul.f32 %v70, 1.442695
  %v74 = vpow.pop %v73
  %v75 = vmul.f32 %v65, -0.1
  %v76 = vmul.f32 %v66, -0.1
  %v77 = vmul.f32 %v75, 1.442695
  %v78 = vpow.pop %v77
  %v79 = vmul.f32 %v76, 1.442695
  %v80 = vpow.pop %v79
  %v81 = vsub.f32 1.0, %v60
  %v82 = vsub.f32 1.0, %v61
  %v83 = vmul.f32 %v58, %v81
  %v84 = vmul.f32 %v59, %v82
  %v85 = vsub.f32 1.0, %v83
  %v86 = vsub.f32 1.0, %v84
  %v87 = vmul.f32 %v85, %v72
  %v88 = vmul.f32 %v86, %v74
  %v89 = vsub.f32 1.0, %v87
  %v90 = vsub.f32 1.0, %v88
  %v91 = vmul.f32 %v81, 0.15
  %v92 = vmul.f32 %v82, 0.15
  %v93 = vadd.f32 %v60, %v91
  %v94 = vadd.f32 %v61, %v92
  %v95 = vsub.f32 %v93, 0.15
  %v96 = vsub.f32 %v94, 0.15
  %v97 = vmul.f32 %v95, %v78
  %v98 = vmul.f32 %v96, %v80
  %v99 = vadd.f32 %v97, 0.15
  %v100 = vadd.f32 %v98, 0.15
  %v101 = vsel %vm67, %v89, %v58
  %v102 = vsel %vm68, %v90, %v59
  %v103 = vsel %vm67, %v99, %v60
  %v104 = vsel %vm68, %v100, %v61
  %s105 = scalar_lea.vmem %s0, 16
  %v106 = vld [vmem:[%s105] sm:$0xf]
  %v107 = vld [vmem:[%s105 + $0x4] sm:$0xf]
  %v108 = vunpack.c.l.bf16 %v106
  %v109 = vunpack.c.l.bf16 %v107
  %vm110 = vcmp.ge.f32.partialorder %v108, 0.0
  %vm111 = vcmp.ge.f32.partialorder %v109, 0.0
  %v112 = vmul.f32 %v108, -1.0
  %v113 = vmul.f32 %v109, -1.0
  %v114 = vmul.f32 %v112, 1.442695
  %v115 = vpow.pop %v114
  %v116 = vmul.f32 %v113, 1.442695
  %v117 = vpow.pop %v116
  %v118 = vmul.f32 %v108, -0.1
  %v119 = vmul.f32 %v109, -0.1
  %v120 = vmul.f32 %v118, 1.442695
  %v121 = vpow.pop %v120
  %v122 = vmul.f32 %v119, 1.442695
  %v123 = vpow.pop %v122
  %v124 = vsub.f32 1.0, %v103
  %v125 = vsub.f32 1.0, %v104
  %v126 = vmul.f32 %v101, %v124
  %v127 = vmul.f32 %v102, %v125
  %v128 = vsub.f32 1.0, %v126
  %v129 = vsub.f32 1.0, %v127
  %v130 = vmul.f32 %v128, %v115
  %v131 = vmul.f32 %v129, %v117
  %v132 = vsub.f32 1.0, %v130
  %v133 = vsub.f32 1.0, %v131
  %v134 = vmul.f32 %v124, 0.15
  %v135 = vmul.f32 %v125, 0.15
  %v136 = vadd.f32 %v103, %v134
  %v137 = vadd.f32 %v104, %v135
  %v138 = vsub.f32 %v136, 0.15
  %v139 = vsub.f32 %v137, 0.15
  %v140 = vmul.f32 %v138, %v121
  %v141 = vmul.f32 %v139, %v123
  %v142 = vadd.f32 %v140, 0.15
  %v143 = vadd.f32 %v141, 0.15
  %v144 = vsel %vm110, %v132, %v101
  %v145 = vsel %vm111, %v133, %v102
  %v146 = vsel %vm110, %v142, %v103
  %v147 = vsel %vm111, %v143, %v104
  %s148 = scalar_lea.vmem %s0, 24
  %v149 = vld [vmem:[%s148] sm:$0xf]
  %v150 = vld [vmem:[%s148 + $0x4] sm:$0xf]
  %v151 = vunpack.c.l.bf16 %v149
  %v152 = vunpack.c.l.bf16 %v150
  %vm153 = vcmp.ge.f32.partialorder %v151, 0.0
  %vm154 = vcmp.ge.f32.partialorder %v152, 0.0
  %v155 = vmul.f32 %v151, -1.0
  %v156 = vmul.f32 %v152, -1.0
  %v157 = vmul.f32 %v155, 1.442695
  %v158 = vpow.pop %v157
  %v159 = vmul.f32 %v156, 1.442695
  %v160 = vpow.pop %v159
  %v161 = vmul.f32 %v151, -0.1
  %v162 = vmul.f32 %v152, -0.1
  %v163 = vmul.f32 %v161, 1.442695
  %v164 = vpow.pop %v163
  %v165 = vmul.f32 %v162, 1.442695
  %v166 = vpow.pop %v165
  %v167 = vsub.f32 1.0, %v146
  %v168 = vsub.f32 1.0, %v147
  %v169 = vmul.f32 %v144, %v167
  %v170 = vmul.f32 %v145, %v168
  %v171 = vsub.f32 1.0, %v169
  %v172 = vsub.f32 1.0, %v170
  %v173 = vmul.f32 %v171, %v158
  %v174 = vmul.f32 %v172, %v160
  %v175 = vsub.f32 1.0, %v173
  %v176 = vsub.f32 1.0, %v174
  %v177 = vmul.f32 %v167, 0.15
  %v178 = vmul.f32 %v168, 0.15
  %v179 = vadd.f32 %v146, %v177
  %v180 = vadd.f32 %v147, %v178
  %v181 = vsub.f32 %v179, 0.15
  %v182 = vsub.f32 %v180, 0.15
  %v183 = vmul.f32 %v181, %v164
  %v184 = vmul.f32 %v182, %v166
  %v185 = vadd.f32 %v183, 0.15
  %v186 = vadd.f32 %v184, 0.15
  %v187 = vsel %vm153, %v175, %v144
  %v188 = vsel %vm154, %v176, %v145
  %v189 = vsel %vm153, %v185, %v146
  %v190 = vsel %vm154, %v186, %v147
  %s191 = scalar_lea.vmem %s0, 32
  %v192 = vld [vmem:[%s191] sm:$0xf]
  %v193 = vld [vmem:[%s191 + $0x4] sm:$0xf]
  %v194 = vunpack.c.l.bf16 %v192
  %v195 = vunpack.c.l.bf16 %v193
  %vm196 = vcmp.ge.f32.partialorder %v194, 0.0
  %vm197 = vcmp.ge.f32.partialorder %v195, 0.0
  %v198 = vmul.f32 %v194, -1.0
  %v199 = vmul.f32 %v195, -1.0
  %v200 = vmul.f32 %v198, 1.442695
  %v201 = vpow.pop %v200
  %v202 = vmul.f32 %v199, 1.442695
  %v203 = vpow.pop %v202
  %v204 = vmul.f32 %v194, -0.1
  %v205 = vmul.f32 %v195, -0.1
  %v206 = vmul.f32 %v204, 1.442695
  %v207 = vpow.pop %v206
  %v208 = vmul.f32 %v205, 1.442695
  %v209 = vpow.pop %v208
  %v210 = vsub.f32 1.0, %v189
  %v211 = vsub.f32 1.0, %v190
  %v212 = vmul.f32 %v187, %v210
  %v213 = vmul.f32 %v188, %v211
  %v214 = vsub.f32 1.0, %v212
  %v215 = vsub.f32 1.0, %v213
  %v216 = vmul.f32 %v214, %v201
  %v217 = vmul.f32 %v215, %v203
  %v218 = vsub.f32 1.0, %v216
  %v219 = vsub.f32 1.0, %v217
  %v220 = vmul.f32 %v210, 0.15
  %v221 = vmul.f32 %v211, 0.15
  %v222 = vadd.f32 %v189, %v220
  %v223 = vadd.f32 %v190, %v221
  %v224 = vsub.f32 %v222, 0.15
  %v225 = vsub.f32 %v223, 0.15
  %v226 = vmul.f32 %v224, %v207
  %v227 = vmul.f32 %v225, %v209
  %v228 = vadd.f32 %v226, 0.15
  %v229 = vadd.f32 %v227, 0.15
  %v230 = vsel %vm196, %v218, %v187
  %v231 = vsel %vm197, %v219, %v188
  %v232 = vsel %vm196, %v228, %v189
  %v233 = vsel %vm197, %v229, %v190
  %s234 = scalar_lea.vmem %s0, 40
  %v235 = vld [vmem:[%s234] sm:$0xf]
  %v236 = vld [vmem:[%s234 + $0x4] sm:$0xf]
  %v237 = vunpack.c.l.bf16 %v235
  %v238 = vunpack.c.l.bf16 %v236
  %vm239 = vcmp.ge.f32.partialorder %v237, 0.0
  %vm240 = vcmp.ge.f32.partialorder %v238, 0.0
  %v241 = vmul.f32 %v237, -1.0
  %v242 = vmul.f32 %v238, -1.0
  %v243 = vmul.f32 %v241, 1.442695
  %v244 = vpow.pop %v243
  %v245 = vmul.f32 %v242, 1.442695
  %v246 = vpow.pop %v245
  %v247 = vmul.f32 %v237, -0.1
  %v248 = vmul.f32 %v238, -0.1
  %v249 = vmul.f32 %v247, 1.442695
  %v250 = vpow.pop %v249
  %v251 = vmul.f32 %v248, 1.442695
  %v252 = vpow.pop %v251
  %v253 = vsub.f32 1.0, %v232
  %v254 = vsub.f32 1.0, %v233
  %v255 = vmul.f32 %v230, %v253
  %v256 = vmul.f32 %v231, %v254
  %v257 = vsub.f32 1.0, %v255
  %v258 = vsub.f32 1.0, %v256
  %v259 = vmul.f32 %v257, %v244
  %v260 = vmul.f32 %v258, %v246
  %v261 = vsub.f32 1.0, %v259
  %v262 = vsub.f32 1.0, %v260
  %v263 = vmul.f32 %v253, 0.15
  %v264 = vmul.f32 %v254, 0.15
  %v265 = vadd.f32 %v232, %v263
  %v266 = vadd.f32 %v233, %v264
  %v267 = vsub.f32 %v265, 0.15
  %v268 = vsub.f32 %v266, 0.15
  %v269 = vmul.f32 %v267, %v250
  %v270 = vmul.f32 %v268, %v252
  %v271 = vadd.f32 %v269, 0.15
  %v272 = vadd.f32 %v270, 0.15
  %v273 = vsel %vm239, %v261, %v230
  %v274 = vsel %vm240, %v262, %v231
  %v275 = vsel %vm239, %v271, %v232
  %v276 = vsel %vm240, %v272, %v233
  %277 = vst [vmem:[#allocation2] sm:$0xff] %v273
  %278 = vst [vmem:[#allocation2 + $0x8] sm:$0xff] %v274
  %279 = vst [vmem:[#allocation3] sm:$0xff] %v275
  %280 = vst [vmem:[#allocation3 + $0x8] sm:$0xff] %v276
  // Predicated region
  $region10: #{_tfstp_impl.1} parent=0 // pred_check
    %p281 = pneg %p8
  $region11: #{_tfstp_impl.1} parent=0 // pred_check_branch
    %283 = sbr.rel (%p281) target = $region13
  $region12: #{_tfstp_impl.1} parent=0 // pred_region
    %v284 = vsub.f32 %v275, 0.15
    %v285 = vsub.f32 %v276, 0.15
    %v286 = vmul.f32 %v275, 0.85
    %v287 = vmul.f32 %v276, 0.85
    %v288 = vadd.f32 %v286, 9.85
    %v289 = vadd.f32 %v287, 9.85
    %v290 = vrcp.pop %v288
    %v291 = vmul.f32 %v284, %v290
    %v292 = vrcp.pop %v289
    %v293 = vmul.f32 %v285, %v292
    %v294 = vlog2.pop %v291
    %v295 = vmul.f32 %v294, 0.6931472
    %v296 = vlog2.pop %v293
    %v297 = vmul.f32 %v296, 0.6931472
    %v298 = vmul.f32 %v295, 10.0
    %v299 = vmul.f32 %v297, 10.0
    %v300 = vrcp.pop %v298
    %v301 = vmul.f32 -1.0, %v300
    %v302 = vrcp.pop %v299
    %v303 = vmul.f32 -1.0, %v302
    %v304 = vsub.f32 1.0, %v273
    %v305 = vsub.f32 1.0, %v274
    %v306 = vsub.f32 1.0, %v275
    %v307 = vsub.f32 1.0, %v276
    %v308 = vmul.f32 %v273, %v306
    %v309 = vmul.f32 %v274, %v307
    %v310 = vsub.f32 1.0, %v308
    %v311 = vsub.f32 1.0, %v309
    %v312 = vrcp.pop %v310
    %v313 = vmul.f32 %v304, %v312
    %v314 = vrcp.pop %v311
    %v315 = vmul.f32 %v305, %v314
    %v316 = vlog2.pop %v313
    %v317 = vmul.f32 %v316, 0.6931472
    %v318 = vlog2.pop %v315
    %v319 = vmul.f32 %v318, 0.6931472
    %v320 = vrcp.pop %v317
    %v321 = vmul.f32 -1.0, %v320
    %v322 = vrcp.pop %v319
    %v323 = vmul.f32 -1.0, %v322
    %v324 = vadd.f32 %v301, %v321
    %v325 = vadd.f32 %v303, %v323
    %326 = vst [vmem:[%s1] sm:$0xff] %v324
    %327 = vst [vmem:[%s1 + $0x8] sm:$0xff] %v325
  $region13: #{_tfstp_impl.1} parent=0 // pred_fallthru
    _
  // Predicated region
  $region14: #{_tfstp_impl.1} parent=0 // pred_check
    _
  $region15: #{_tfstp_impl.1} parent=0 // pred_check_branch
    %329 = sbr.rel (0) target = $region17
  $region16: #{_tfstp_impl.1} parent=0 // pred_region
    _
  $region17: #{_tfstp_impl.1} parent=0 // pred_fallthru
    _
  // Predicated region
  $region18: #{_tfstp_impl.1} parent=0 // pred_check
    _
  $region19: #{_tfstp_impl.1} parent=0 // pred_check_branch
    %331 = sbr.rel (0) target = $region21
  $region20: #{_tfstp_impl.1} parent=0 // pred_region
    _
  $region21: #{_tfstp_impl.1} parent=0 // pred_fallthru
    _

</llo_original>
